<compile_context>
chip_gen: v7x
topology: tpu7x:2x2x1
jax: 0.10.0
libtpu: 0.0.40
codegen_flags: <defaults>
</compile_context>

<pallas_src>
import functools

import jax
import jax.numpy as jnp
from jax.experimental import pallas as pl
from jax.experimental.pallas import tpu as pltpu

INPUT_SIZE = 32                      # "input_size" of the PyTorch module (small demo value)
HIDDEN_SIZES = [64, 128, 256, 256, 128, 64]
OUTPUT_SIZE = 6                      # fc7 -> 6
OUT_PAD = 128                        # lane-dense padded output width
LAYER_SIZES = [INPUT_SIZE] + HIDDEN_SIZES + [OUTPUT_SIZE]


def _round_up(n, m):
    return ((n + m - 1) // m) * m


def mlp_kernel(x_ref,
               w1, b1, w2, b2, w3, b3, w4, b4, w5, b5, w6, b6, w7, b7,
               o_ref):
    """One batch tile of the MLP.  x_ref: (TB, INPUT_SIZE) f32, o_ref: (TB, OUT_PAD) f32.

    Weights (bf16) / biases (f32) are full-array resident blocks (constant index_map).
    """
    h = x_ref[...]  # f32 activations

    def linear(h, w_ref, b_ref, relu):
        # bf16 MXU operands, f32 accumulation; bias add + ReLU stay f32 (VPU).
        y = jnp.dot(h.astype(jnp.bfloat16), w_ref[...],
                    preferred_element_type=jnp.float32) + b_ref[...]
        return jnp.maximum(y, 0.0) if relu else y

    h = linear(h, w1, b1, True)
    h = linear(h, w2, b2, True)
    h = linear(h, w3, b3, True)
    h = linear(h, w4, b4, True)
    h = linear(h, w5, b5, True)
    h = linear(h, w6, b6, True)
    y = linear(h, w7, b7, False)          # (TB, OUT_PAD) lane-dense final store
    o_ref[...] = y


@functools.partial(jax.jit, static_argnames=("tb",))
def mlp_forward(x, flat_params, *, tb=256):
    """x: (B, INPUT_SIZE) f32.  flat_params: [w1,b1,...,w7,b7] with W:(in,out) bf16,
    b:(1,out) f32; w7/b7 already lane-padded to OUT_PAD.  Returns (B, OUTPUT_SIZE) f32."""
    B = x.shape[0]
    TB = min(tb, _round_up(B, 8))         # multiple of 8 sublanes, cap at MXU height
    Bp = _round_up(B, TB)
    if Bp != B:
        x = jnp.pad(x, ((0, Bp - B), (0, 0)))
    grid = (Bp // TB,)

    # Activation tile marches over the batch; weights/biases pinned to block (0, 0)
    # so they are fetched once and stay resident in VMEM across grid steps.
    x_spec = pl.BlockSpec((TB, INPUT_SIZE), lambda i: (i, 0))
    const_spec = lambda a: pl.BlockSpec(a.shape, lambda i: (0, 0))
    in_specs = [x_spec] + [const_spec(a) for a in flat_params]
    out_spec = pl.BlockSpec((TB, OUT_PAD), lambda i: (i, 0))
    out_shape = jax.ShapeDtypeStruct((Bp, OUT_PAD), jnp.float32)

    flops = 2 * Bp * sum(LAYER_SIZES[i] * LAYER_SIZES[i + 1]
                         for i in range(len(LAYER_SIZES) - 1))
    bytes_accessed = (x.size * x.dtype.itemsize
                      + sum(a.size * a.dtype.itemsize for a in flat_params)
                      + Bp * OUT_PAD * 4)

    out = pl.pallas_call(
        mlp_kernel,
        out_shape=out_shape,
        grid=grid,
        in_specs=in_specs,
        out_specs=out_spec,
        compiler_params=pltpu.CompilerParams(
            dimension_semantics=("parallel",)),
        cost_estimate=pl.CostEstimate(
            flops=flops, transcendentals=0, bytes_accessed=bytes_accessed),
    )(x, *flat_params)

    return out[:B, :OUTPUT_SIZE]


def init_params(key):
    """Deterministic init matching the PyTorch layer shapes.
    Weights stored (in, out) in bf16; biases (1, out) in f32."""
    params = []
    for i in range(len(LAYER_SIZES) - 1):
        fan_in, fan_out = LAYER_SIZES[i], LAYER_SIZES[i + 1]
        key, kw, kb = jax.random.split(key, 3)
        bound = 1.0 / jnp.sqrt(fan_in)
        w = jax.random.uniform(kw, (fan_in, fan_out), jnp.float32, -bound, bound)
        b = jax.random.uniform(kb, (1, fan_out), jnp.float32, -bound, bound)
        params.append((w.astype(jnp.bfloat16), b))
    return params


def flatten_params(params):
    """Flatten to [w1,b1,...,w7,b7]; lane-pad the final layer to OUT_PAD."""
    flat = []
    for i, (w, b) in enumerate(params):
        if i == len(params) - 1:
            w = jnp.pad(w, ((0, 0), (0, OUT_PAD - OUTPUT_SIZE)))
            b = jnp.pad(b, ((0, 0), (0, OUT_PAD - OUTPUT_SIZE)))
        flat.extend([w, b])
    return flat


def mlp_reference(x, params):
    """Pure-JAX reference using the same bf16-operand / f32-accumulate arithmetic."""
    h = x
    for i, (w, b) in enumerate(params):
        h = jnp.dot(h.astype(jnp.bfloat16), w,
                    preferred_element_type=jnp.float32) + b
        if i < len(params) - 1:
            h = jnp.maximum(h, 0.0)
    return h


if __name__ == "__main__":
    key = jax.random.PRNGKey(0)
    key, kx = jax.random.split(key)
    batch = 8
    x = jax.random.normal(kx, (batch, INPUT_SIZE), jnp.float32)

    params = init_params(key)
    flat = flatten_params(params)

    out = mlp_forward(x, flat)
    out = jax.block_until_ready(out)

    ref = mlp_reference(x, params)
    assert out.shape == (batch, OUTPUT_SIZE)
    assert jnp.allclose(out, ref, atol=1e-3, rtol=1e-3), "Pallas output mismatch vs reference"

    print("KERNEL_OK")
</pallas_src>

<mosaic_0001>
module attributes {stable_mosaic.version = 11 : i64} {
  func.func @mlp_kernel(%arg0: i32, %arg1: memref<8x32xf32, #tpu.memory_space<vmem>>, %arg2: memref<32x64xbf16, #tpu.memory_space<vmem>>, %arg3: memref<1x64xf32, #tpu.memory_space<vmem>>, %arg4: memref<64x128xbf16, #tpu.memory_space<vmem>>, %arg5: memref<1x128xf32, #tpu.memory_space<vmem>>, %arg6: memref<128x256xbf16, #tpu.memory_space<vmem>>, %arg7: memref<1x256xf32, #tpu.memory_space<vmem>>, %arg8: memref<256x256xbf16, #tpu.memory_space<vmem>>, %arg9: memref<1x256xf32, #tpu.memory_space<vmem>>, %arg10: memref<256x128xbf16, #tpu.memory_space<vmem>>, %arg11: memref<1x128xf32, #tpu.memory_space<vmem>>, %arg12: memref<128x64xbf16, #tpu.memory_space<vmem>>, %arg13: memref<1x64xf32, #tpu.memory_space<vmem>>, %arg14: memref<64x128xbf16, #tpu.memory_space<vmem>>, %arg15: memref<1x128xf32, #tpu.memory_space<vmem>>, %arg16: memref<8x128xf32, #tpu.memory_space<vmem>>) attributes {dimension_semantics = [#tpu.dimension_semantics<parallel>], iteration_bounds = array<i64: 1>, scalar_prefetch = 0 : i64, scratch_operands = 0 : i64, tpu.core_type = #tpu.core_type<tc>, window_params = [{transform_indices = @transform_0, window_bounds = array<i64: 8, 32>}, {pipeline_mode = #tpu.pipeline_mode<synchronous>, transform_indices = @transform_1, window_bounds = array<i64: 32, 64>}, {pipeline_mode = #tpu.pipeline_mode<synchronous>, transform_indices = @transform_2, window_bounds = array<i64: 1, 64>}, {pipeline_mode = #tpu.pipeline_mode<synchronous>, transform_indices = @transform_3, window_bounds = array<i64: 64, 128>}, {pipeline_mode = #tpu.pipeline_mode<synchronous>, transform_indices = @transform_4, window_bounds = array<i64: 1, 128>}, {pipeline_mode = #tpu.pipeline_mode<synchronous>, transform_indices = @transform_5, window_bounds = array<i64: 128, 256>}, {pipeline_mode = #tpu.pipeline_mode<synchronous>, transform_indices = @transform_6, window_bounds = array<i64: 1, 256>}, {pipeline_mode = #tpu.pipeline_mode<synchronous>, transform_indices = @transform_7, window_bounds = array<i64: 256, 256>}, {pipeline_mode = #tpu.pipeline_mode<synchronous>, transform_indices = @transform_8, window_bounds = array<i64: 1, 256>}, {pipeline_mode = #tpu.pipeline_mode<synchronous>, transform_indices = @transform_9, window_bounds = array<i64: 256, 128>}, {pipeline_mode = #tpu.pipeline_mode<synchronous>, transform_indices = @transform_10, window_bounds = array<i64: 1, 128>}, {pipeline_mode = #tpu.pipeline_mode<synchronous>, transform_indices = @transform_11, window_bounds = array<i64: 128, 64>}, {pipeline_mode = #tpu.pipeline_mode<synchronous>, transform_indices = @transform_12, window_bounds = array<i64: 1, 64>}, {pipeline_mode = #tpu.pipeline_mode<synchronous>, transform_indices = @transform_13, window_bounds = array<i64: 64, 128>}, {pipeline_mode = #tpu.pipeline_mode<synchronous>, transform_indices = @transform_14, window_bounds = array<i64: 1, 128>}, {transform_indices = @transform_15, window_bounds = array<i64: 8, 128>}]} {
    %c0 = arith.constant 0 : index
    %c0_0 = arith.constant 0 : index
    %0 = vector.load %arg1[%c0, %c0_0] : memref<8x32xf32, #tpu.memory_space<vmem>>, vector<8x32xf32>
    %1 = arith.truncf %0 : vector<8x32xf32> to vector<8x32xbf16>
    %c0_1 = arith.constant 0 : index
    %c0_2 = arith.constant 0 : index
    %2 = vector.load %arg2[%c0_1, %c0_2] : memref<32x64xbf16, #tpu.memory_space<vmem>>, vector<32x64xbf16>
    %cst = arith.constant dense<0.000000e+00> : vector<8x64xf32>
    %3 = tpu.matmul %1, %2, %cst {dimension_numbers = #tpu.dot_dimension_numbers<[1], [0], [0], [1], [0, 0, 1, 1], [], []>} : vector<8x32xbf16>, vector<32x64xbf16>, vector<8x64xf32> -> vector<8x64xf32>
    %c0_3 = arith.constant 0 : index
    %c0_4 = arith.constant 0 : index
    %4 = vector.load %arg3[%c0_3, %c0_4] : memref<1x64xf32, #tpu.memory_space<vmem>>, vector<1x64xf32>
    %5 = vector.broadcast %4 : vector<1x64xf32> to vector<8x64xf32>
    %6 = arith.addf %3, %5 : vector<8x64xf32>
    %cst_5 = arith.constant 0.000000e+00 : f32
    %7 = vector.broadcast %cst_5 : f32 to vector<8x64xf32>
    %8 = arith.maximumf %6, %7 : vector<8x64xf32>
    %9 = arith.truncf %8 : vector<8x64xf32> to vector<8x64xbf16>
    %c0_6 = arith.constant 0 : index
    %c0_7 = arith.constant 0 : index
    %10 = vector.load %arg4[%c0_6, %c0_7] : memref<64x128xbf16, #tpu.memory_space<vmem>>, vector<64x128xbf16>
    %cst_8 = arith.constant dense<0.000000e+00> : vector<8x128xf32>
    %11 = tpu.matmul %9, %10, %cst_8 {dimension_numbers = #tpu.dot_dimension_numbers<[1], [0], [0], [1], [0, 0, 1, 1], [], []>} : vector<8x64xbf16>, vector<64x128xbf16>, vector<8x128xf32> -> vector<8x128xf32>
    %c0_9 = arith.constant 0 : index
    %c0_10 = arith.constant 0 : index
    %12 = vector.load %arg5[%c0_9, %c0_10] : memref<1x128xf32, #tpu.memory_space<vmem>>, vector<1x128xf32>
    %13 = vector.broadcast %12 : vector<1x128xf32> to vector<8x128xf32>
    %14 = arith.addf %11, %13 : vector<8x128xf32>
    %cst_11 = arith.constant 0.000000e+00 : f32
    %15 = vector.broadcast %cst_11 : f32 to vector<8x128xf32>
    %16 = arith.maximumf %14, %15 : vector<8x128xf32>
    %17 = arith.truncf %16 : vector<8x128xf32> to vector<8x128xbf16>
    %c0_12 = arith.constant 0 : index
    %c0_13 = arith.constant 0 : index
    %18 = vector.load %arg6[%c0_12, %c0_13] : memref<128x256xbf16, #tpu.memory_space<vmem>>, vector<128x256xbf16>
    %cst_14 = arith.constant dense<0.000000e+00> : vector<8x256xf32>
    %19 = tpu.matmul %17, %18, %cst_14 {dimension_numbers = #tpu.dot_dimension_numbers<[1], [0], [0], [1], [0, 0, 1, 1], [], []>} : vector<8x128xbf16>, vector<128x256xbf16>, vector<8x256xf32> -> vector<8x256xf32>
    %c0_15 = arith.constant 0 : index
    %c0_16 = arith.constant 0 : index
    %20 = vector.load %arg7[%c0_15, %c0_16] : memref<1x256xf32, #tpu.memory_space<vmem>>, vector<1x256xf32>
    %21 = vector.broadcast %20 : vector<1x256xf32> to vector<8x256xf32>
    %22 = arith.addf %19, %21 : vector<8x256xf32>
    %cst_17 = arith.constant 0.000000e+00 : f32
    %23 = vector.broadcast %cst_17 : f32 to vector<8x256xf32>
    %24 = arith.maximumf %22, %23 : vector<8x256xf32>
    %25 = arith.truncf %24 : vector<8x256xf32> to vector<8x256xbf16>
    %c0_18 = arith.constant 0 : index
    %c0_19 = arith.constant 0 : index
    %26 = vector.load %arg8[%c0_18, %c0_19] : memref<256x256xbf16, #tpu.memory_space<vmem>>, vector<256x256xbf16>
    %cst_20 = arith.constant dense<0.000000e+00> : vector<8x256xf32>
    %27 = tpu.matmul %25, %26, %cst_20 {dimension_numbers = #tpu.dot_dimension_numbers<[1], [0], [0], [1], [0, 0, 1, 1], [], []>} : vector<8x256xbf16>, vector<256x256xbf16>, vector<8x256xf32> -> vector<8x256xf32>
    %c0_21 = arith.constant 0 : index
    %c0_22 = arith.constant 0 : index
    %28 = vector.load %arg9[%c0_21, %c0_22] : memref<1x256xf32, #tpu.memory_space<vmem>>, vector<1x256xf32>
    %29 = vector.broadcast %28 : vector<1x256xf32> to vector<8x256xf32>
    %30 = arith.addf %27, %29 : vector<8x256xf32>
    %cst_23 = arith.constant 0.000000e+00 : f32
    %31 = vector.broadcast %cst_23 : f32 to vector<8x256xf32>
    %32 = arith.maximumf %30, %31 : vector<8x256xf32>
    %33 = arith.truncf %32 : vector<8x256xf32> to vector<8x256xbf16>
    %c0_24 = arith.constant 0 : index
    %c0_25 = arith.constant 0 : index
    %34 = vector.load %arg10[%c0_24, %c0_25] : memref<256x128xbf16, #tpu.memory_space<vmem>>, vector<256x128xbf16>
    %cst_26 = arith.constant dense<0.000000e+00> : vector<8x128xf32>
    %35 = tpu.matmul %33, %34, %cst_26 {dimension_numbers = #tpu.dot_dimension_numbers<[1], [0], [0], [1], [0, 0, 1, 1], [], []>} : vector<8x256xbf16>, vector<256x128xbf16>, vector<8x128xf32> -> vector<8x128xf32>
    %c0_27 = arith.constant 0 : index
    %c0_28 = arith.constant 0 : index
    %36 = vector.load %arg11[%c0_27, %c0_28] : memref<1x128xf32, #tpu.memory_space<vmem>>, vector<1x128xf32>
    %37 = vector.broadcast %36 : vector<1x128xf32> to vector<8x128xf32>
    %38 = arith.addf %35, %37 : vector<8x128xf32>
    %cst_29 = arith.constant 0.000000e+00 : f32
    %39 = vector.broadcast %cst_29 : f32 to vector<8x128xf32>
    %40 = arith.maximumf %38, %39 : vector<8x128xf32>
    %41 = arith.truncf %40 : vector<8x128xf32> to vector<8x128xbf16>
    %c0_30 = arith.constant 0 : index
    %c0_31 = arith.constant 0 : index
    %42 = vector.load %arg12[%c0_30, %c0_31] : memref<128x64xbf16, #tpu.memory_space<vmem>>, vector<128x64xbf16>
    %cst_32 = arith.constant dense<0.000000e+00> : vector<8x64xf32>
    %43 = tpu.matmul %41, %42, %cst_32 {dimension_numbers = #tpu.dot_dimension_numbers<[1], [0], [0], [1], [0, 0, 1, 1], [], []>} : vector<8x128xbf16>, vector<128x64xbf16>, vector<8x64xf32> -> vector<8x64xf32>
    %c0_33 = arith.constant 0 : index
    %c0_34 = arith.constant 0 : index
    %44 = vector.load %arg13[%c0_33, %c0_34] : memref<1x64xf32, #tpu.memory_space<vmem>>, vector<1x64xf32>
    %45 = vector.broadcast %44 : vector<1x64xf32> to vector<8x64xf32>
    %46 = arith.addf %43, %45 : vector<8x64xf32>
    %cst_35 = arith.constant 0.000000e+00 : f32
    %47 = vector.broadcast %cst_35 : f32 to vector<8x64xf32>
    %48 = arith.maximumf %46, %47 : vector<8x64xf32>
    %49 = arith.truncf %48 : vector<8x64xf32> to vector<8x64xbf16>
    %c0_36 = arith.constant 0 : index
    %c0_37 = arith.constant 0 : index
    %50 = vector.load %arg14[%c0_36, %c0_37] : memref<64x128xbf16, #tpu.memory_space<vmem>>, vector<64x128xbf16>
    %cst_38 = arith.constant dense<0.000000e+00> : vector<8x128xf32>
    %51 = tpu.matmul %49, %50, %cst_38 {dimension_numbers = #tpu.dot_dimension_numbers<[1], [0], [0], [1], [0, 0, 1, 1], [], []>} : vector<8x64xbf16>, vector<64x128xbf16>, vector<8x128xf32> -> vector<8x128xf32>
    %c0_39 = arith.constant 0 : index
    %c0_40 = arith.constant 0 : index
    %52 = vector.load %arg15[%c0_39, %c0_40] : memref<1x128xf32, #tpu.memory_space<vmem>>, vector<1x128xf32>
    %53 = vector.broadcast %52 : vector<1x128xf32> to vector<8x128xf32>
    %54 = arith.addf %51, %53 : vector<8x128xf32>
    %c0_41 = arith.constant 0 : index
    %c0_42 = arith.constant 0 : index
    %55 = vector.load %arg16[%c0_41, %c0_42] : memref<8x128xf32, #tpu.memory_space<vmem>>, vector<8x128xf32>
    tpu.vector_store %arg16[%c0_41, %c0_42], %54 {strides = array<i32>} : memref<8x128xf32, #tpu.memory_space<vmem>>, vector<8x128xf32>,
    return
  }
  func.func @transform_0(%arg0: i32) -> (i32, i32) {
    %c0_i32 = arith.constant 0 : i32
    %c0_i32_0 = arith.constant 0 : i32
    return %arg0, %c0_i32 : i32, i32
  }
  func.func @transform_1(%arg0: i32) -> (i32, i32) {
    %c0_i32 = arith.constant 0 : i32
    %c0_i32_0 = arith.constant 0 : i32
    %c0_i32_1 = arith.constant 0 : i32
    return %c0_i32, %c0_i32_0 : i32, i32
  }
  func.func @transform_2(%arg0: i32) -> (i32, i32) {
    %c0_i32 = arith.constant 0 : i32
    %c0_i32_0 = arith.constant 0 : i32
    %c0_i32_1 = arith.constant 0 : i32
    return %c0_i32, %c0_i32_0 : i32, i32
  }
  func.func @transform_3(%arg0: i32) -> (i32, i32) {
    %c0_i32 = arith.constant 0 : i32
    %c0_i32_0 = arith.constant 0 : i32
    %c0_i32_1 = arith.constant 0 : i32
    return %c0_i32, %c0_i32_0 : i32, i32
  }
  func.func @transform_4(%arg0: i32) -> (i32, i32) {
    %c0_i32 = arith.constant 0 : i32
    %c0_i32_0 = arith.constant 0 : i32
    %c0_i32_1 = arith.constant 0 : i32
    return %c0_i32, %c0_i32_0 : i32, i32
  }
  func.func @transform_5(%arg0: i32) -> (i32, i32) {
    %c0_i32 = arith.constant 0 : i32
    %c0_i32_0 = arith.constant 0 : i32
    %c0_i32_1 = arith.constant 0 : i32
    return %c0_i32, %c0_i32_0 : i32, i32
  }
  func.func @transform_6(%arg0: i32) -> (i32, i32) {
    %c0_i32 = arith.constant 0 : i32
    %c0_i32_0 = arith.constant 0 : i32
    %c0_i32_1 = arith.constant 0 : i32
    return %c0_i32, %c0_i32_0 : i32, i32
  }
  func.func @transform_7(%arg0: i32) -> (i32, i32) {
    %c0_i32 = arith.constant 0 : i32
    %c0_i32_0 = arith.constant 0 : i32
    %c0_i32_1 = arith.constant 0 : i32
    return %c0_i32, %c0_i32_0 : i32, i32
  }
  func.func @transform_8(%arg0: i32) -> (i32, i32) {
    %c0_i32 = arith.constant 0 : i32
    %c0_i32_0 = arith.constant 0 : i32
    %c0_i32_1 = arith.constant 0 : i32
    return %c0_i32, %c0_i32_0 : i32, i32
  }
  func.func @transform_9(%arg0: i32) -> (i32, i32) {
    %c0_i32 = arith.constant 0 : i32
    %c0_i32_0 = arith.constant 0 : i32
    %c0_i32_1 = arith.constant 0 : i32
    return %c0_i32, %c0_i32_0 : i32, i32
  }
  func.func @transform_10(%arg0: i32) -> (i32, i32) {
    %c0_i32 = arith.constant 0 : i32
    %c0_i32_0 = arith.constant 0 : i32
    %c0_i32_1 = arith.constant 0 : i32
    return %c0_i32, %c0_i32_0 : i32, i32
  }
  func.func @transform_11(%arg0: i32) -> (i32, i32) {
    %c0_i32 = arith.constant 0 : i32
    %c0_i32_0 = arith.constant 0 : i32
    %c0_i32_1 = arith.constant 0 : i32
    return %c0_i32, %c0_i32_0 : i32, i32
  }
  func.func @transform_12(%arg0: i32) -> (i32, i32) {
    %c0_i32 = arith.constant 0 : i32
    %c0_i32_0 = arith.constant 0 : i32
    %c0_i32_1 = arith.constant 0 : i32
    return %c0_i32, %c0_i32_0 : i32, i32
  }
  func.func @transform_13(%arg0: i32) -> (i32, i32) {
    %c0_i32 = arith.constant 0 : i32
    %c0_i32_0 = arith.constant 0 : i32
    %c0_i32_1 = arith.constant 0 : i32
    return %c0_i32, %c0_i32_0 : i32, i32
  }
  func.func @transform_14(%arg0: i32) -> (i32, i32) {
    %c0_i32 = arith.constant 0 : i32
    %c0_i32_0 = arith.constant 0 : i32
    %c0_i32_1 = arith.constant 0 : i32
    return %c0_i32, %c0_i32_0 : i32, i32
  }
  func.func @transform_15(%arg0: i32) -> (i32, i32) {
    %c0_i32 = arith.constant 0 : i32
    %c0_i32_0 = arith.constant 0 : i32
    return %arg0, %c0_i32 : i32, i32
  }
}

</mosaic_0001>

<llo_original>
// kernel: mlp_forward.1
$region0: #{mlp_forward.1}
  #allocation0 [shape = 'u32[]', space=smem, size = 0x4, offset = 0x4, fixed_abs, tag = 'smem constant byte address 0x4 - core index']
  #allocation1 [shape = 'u32[144,128]{1,0:T(1,128)}', space=vmem, size = 0x12000, scoped, tag = 'internal scratch']
  %s0 = inlined_call_operand.hbm [shape: f32[8,32], index: 0, kind: input, shape index: {}]
  %s1 = inlined_call_operand.hbm [shape: bf16[32,64], index: 1, kind: input, shape index: {}]
  %s2 = inlined_call_operand.hbm [shape: f32[1,64], index: 2, kind: input, shape index: {}]
  %s3 = inlined_call_operand.hbm [shape: bf16[64,128], index: 3, kind: input, shape index: {}]
  %s4 = inlined_call_operand.hbm [shape: f32[1,128], index: 4, kind: input, shape index: {}]
  %s5 = inlined_call_operand.hbm [shape: bf16[128,256], index: 5, kind: input, shape index: {}]
  %s6 = inlined_call_operand.vmem [shape: f32[1,256], index: 6, kind: input, shape index: {}]
  %s7 = inlined_call_operand.hbm [shape: bf16[256,256], index: 7, kind: input, shape index: {}]
  %s8 = inlined_call_operand.hbm [shape: f32[1,256], index: 8, kind: input, shape index: {}]
  %s9 = inlined_call_operand.vmem [shape: bf16[256,128], index: 9, kind: input, shape index: {}]
  %s10 = inlined_call_operand.vmem [shape: f32[1,128], index: 10, kind: input, shape index: {}]
  %s11 = inlined_call_operand.vmem [shape: bf16[128,64], index: 11, kind: input, shape index: {}]
  %s12 = inlined_call_operand.vmem [shape: f32[1,64], index: 12, kind: input, shape index: {}]
  %s13 = inlined_call_operand.hbm [shape: bf16[64,128], index: 13, kind: input, shape index: {}]
  %s14 = inlined_call_operand.vmem [shape: f32[1,128], index: 14, kind: input, shape index: {}]
  %s15 = inlined_call_operand.hbm [shape: f32[8,128], index: 15, kind: output, shape index: {}]
  %s16 = sld [smem:[#allocation0]]
  $region106: #{mlp_forward.1} parent=0
    _
  %s18 = ssub.s32 1, %s16
  %s19 = scalar_select 0, %s18, %s16
  $region1: #{mlp_forward.1} parent=0
    #allocation2 [shape = 'u8[4096]{0}', space=vmem, size = 0x1000, scoped, tag = 'input window, operand 0, single buffered']
    #allocation3 [shape = 's32[1]{0}', space=sflag, size = 0x4, scoped, tag = 'scoped memory for mlp_forward.1']
    #allocation4 [shape = 's32[1]{0}', space=sflag, size = 0x4, scoped, tag = 'scoped memory for mlp_forward.1']
    #allocation5 [shape = 'u8[8192]{0}', space=vmem, size = 0x2000, scoped, tag = 'input window, operand 1, single buffered']
    #allocation6 [shape = 's32[1]{0}', space=sflag, size = 0x4, scoped, tag = 'scoped memory for mlp_forward.1']
    #allocation7 [shape = 'u8[512]{0}', space=vmem, size = 0x400, scoped, tag = 'input window, operand 2, single buffered']
    #allocation8 [shape = 'u8[16384]{0}', space=vmem, size = 0x4000, scoped, tag = 'input window, operand 3, single buffered']
    #allocation9 [shape = 's32[1]{0}', space=sflag, size = 0x4, scoped, tag = 'scoped memory for mlp_forward.1']
    #allocation10 [shape = 'u8[512]{0}', space=vmem, size = 0x400, scoped, tag = 'input window, operand 4, single buffered']
    #allocation11 [shape = 'u8[65536]{0}', space=vmem, size = 0x10000, scoped, tag = 'input window, operand 5, single buffered']
    #allocation12 [shape = 's32[1]{0}', space=sflag, size = 0x4, scoped, tag = 'scoped memory for mlp_forward.1']
    #allocation13 [shape = 'u8[131072]{0}', space=vmem, size = 0x20000, scoped, tag = 'input window, operand 7, single buffered']
    #allocation14 [shape = 'u8[1024]{0}', space=vmem, size = 0x400, scoped, tag = 'input window, operand 8, single buffered']
    #allocation15 [shape = 's32[1]{0}', space=sflag, size = 0x4, scoped, tag = 'scoped memory for mlp_forward.1']
    #allocation16 [shape = 'u8[16384]{0}', space=vmem, size = 0x4000, scoped, tag = 'input window, operand 13, single buffered']
    #allocation17 [shape = 'u8[4096]{0}', space=vmem, size = 0x1000, scoped, tag = 'output window, operand 0, single buffered']
    %20 = vsyncpa [#allocation3], 0
    %21 = vsyncpa [#allocation6], 0
    %22 = vsyncpa [#allocation9], 0
    %23 = vsyncpa [#allocation12], 0
    %24 = vsyncpa [#allocation15], 0
    %25 = vsyncpa [#allocation4], 0
    // Predicated region
    $region2: #{mlp_forward.1} parent=1 // pred_check
      _
    $region3: #{mlp_forward.1} parent=1 // pred_check_branch
      %27 = sbr.rel (0) target = $region5
    $region4: #{mlp_forward.1} parent=1 // pred_region
      %s29 = ssub.s32 128, 128
      %30 = vsyncadd [#allocation3], %s29
      %s32 = sshll.u32 [#allocation2], 4
      %s33 = int_to_ptr.vmem [resolvable:$true] %s32
      %35 = dma.hbm_to_vmem [thread:$0]  %s0, 128, %s33, [#allocation3]
    $region5: #{mlp_forward.1} parent=1 // pred_fallthru
      _
    // Predicated region
    $region6: #{mlp_forward.1} parent=1 // pred_check
      _
    $region7: #{mlp_forward.1} parent=1 // pred_check_branch
      %37 = sbr.rel (0) target = $region9
    $region8: #{mlp_forward.1} parent=1 // pred_region
      %s39 = ssub.s32 256, 256
      %40 = vsyncadd [#allocation6], %s39
      %s41 = sshll.u32 [#allocation5], 4
      %s42 = int_to_ptr.vmem [resolvable:$true] %s41
      %47 = dma.hbm_to_vmem [thread:$0]  %s1, 256, %s42, [#allocation6], 64, 64, 4
    $region9: #{mlp_forward.1} parent=1 // pred_fallthru
      _
    // Predicated region
    $region10: #{mlp_forward.1} parent=1 // pred_check
      _
    $region11: #{mlp_forward.1} parent=1 // pred_check_branch
      %49 = sbr.rel (0) target = $region13
    $region12: #{mlp_forward.1} parent=1 // pred_region
      %s51 = ssub.s32 16, 16
      %52 = vsyncadd [#allocation6], %s51
      %s54 = sshll.u32 [#allocation7], 4
      %s55 = int_to_ptr.vmem [resolvable:$true] %s54
      %57 = dma.hbm_to_vmem [thread:$0]  %s2, 16, %s55, [#allocation6]
    $region13: #{mlp_forward.1} parent=1 // pred_fallthru
      _
    // Predicated region
    $region14: #{mlp_forward.1} parent=1 // pred_check
      _
    $region15: #{mlp_forward.1} parent=1 // pred_check_branch
      %59 = sbr.rel (0) target = $region17
    $region16: #{mlp_forward.1} parent=1 // pred_region
      %s61 = ssub.s32 512, 512
      %62 = vsyncadd [#allocation9], %s61
      %s63 = sshll.u32 [#allocation8], 4
      %s64 = int_to_ptr.vmem [resolvable:$true] %s63
      %69 = dma.hbm_to_vmem [thread:$0]  %s3, 512, %s64, [#allocation9], 64, 64, 4
    $region17: #{mlp_forward.1} parent=1 // pred_fallthru
      _
    // Predicated region
    $region18: #{mlp_forward.1} parent=1 // pred_check
      _
    $region19: #{mlp_forward.1} parent=1 // pred_check_branch
      %71 = sbr.rel (0) target = $region21
    $region20: #{mlp_forward.1} parent=1 // pred_region
      %s73 = ssub.s32 16, 16
      %74 = vsyncadd [#allocation9], %s73
      %s76 = sshll.u32 [#allocation10], 4
      %s77 = int_to_ptr.vmem [resolvable:$true] %s76
      %79 = dma.hbm_to_vmem [thread:$0]  %s4, 16, %s77, [#allocation9]
    $region21: #{mlp_forward.1} parent=1 // pred_fallthru
      _
    // Predicated region
    $region22: #{mlp_forward.1} parent=1 // pred_check
      _
    $region23: #{mlp_forward.1} parent=1 // pred_check_branch
      %81 = sbr.rel (0) target = $region25
    $region24: #{mlp_forward.1} parent=1 // pred_region
      %s83 = ssub.s32 2048, 2048
      %84 = vsyncadd [#allocation12], %s83
      %s85 = sshll.u32 [#allocation11], 4
      %s86 = int_to_ptr.vmem [resolvable:$true] %s85
      %91 = dma.hbm_to_vmem [thread:$0]  %s5, 2048, %s86, [#allocation12], 128, 128, 8
    $region25: #{mlp_forward.1} parent=1 // pred_fallthru
      _
    // Predicated region
    $region26: #{mlp_forward.1} parent=1 // pred_check
      _
    $region27: #{mlp_forward.1} parent=1 // pred_check_branch
      %93 = sbr.rel (0) target = $region29
    $region28: #{mlp_forward.1} parent=1 // pred_region
      _
    $region29: #{mlp_forward.1} parent=1 // pred_fallthru
      _
    // Predicated region
    $region30: #{mlp_forward.1} parent=1 // pred_check
      _
    $region31: #{mlp_forward.1} parent=1 // pred_check_branch
      %95 = sbr.rel (0) target = $region33
    $region32: #{mlp_forward.1} parent=1 // pred_region
      %s97 = ssub.s32 4096, 4096
      %98 = vsyncadd [#allocation12], %s97
      %s99 = sshll.u32 [#allocation13], 4
      %s100 = int_to_ptr.vmem [resolvable:$true] %s99
      %105 = dma.hbm_to_vmem [thread:$0]  %s7, 4096, %s100, [#allocation12], 128, 128, 8
    $region33: #{mlp_forward.1} parent=1 // pred_fallthru
      _
    // Predicated region
    $region34: #{mlp_forward.1} parent=1 // pred_check
      _
    $region35: #{mlp_forward.1} parent=1 // pred_check_branch
      %107 = sbr.rel (0) target = $region37
    $region36: #{mlp_forward.1} parent=1 // pred_region
      %s109 = ssub.s32 32, 32
      %110 = vsyncadd [#allocation15], %s109
      %s112 = sshll.u32 [#allocation14], 4
      %s113 = int_to_ptr.vmem [resolvable:$true] %s112
      %115 = dma.hbm_to_vmem [thread:$0]  %s8, 32, %s113, [#allocation15]
    $region37: #{mlp_forward.1} parent=1 // pred_fallthru
      _
    // Predicated region
    $region38: #{mlp_forward.1} parent=1 // pred_check
      _
    $region39: #{mlp_forward.1} parent=1 // pred_check_branch
      %117 = sbr.rel (0) target = $region41
    $region40: #{mlp_forward.1} parent=1 // pred_region
      _
    $region41: #{mlp_forward.1} parent=1 // pred_fallthru
      _
    // Predicated region
    $region42: #{mlp_forward.1} parent=1 // pred_check
      _
    $region43: #{mlp_forward.1} parent=1 // pred_check_branch
      %119 = sbr.rel (0) target = $region45
    $region44: #{mlp_forward.1} parent=1 // pred_region
      _
    $region45: #{mlp_forward.1} parent=1 // pred_fallthru
      _
    // Predicated region
    $region46: #{mlp_forward.1} parent=1 // pred_check
      _
    $region47: #{mlp_forward.1} parent=1 // pred_check_branch
      %121 = sbr.rel (0) target = $region49
    $region48: #{mlp_forward.1} parent=1 // pred_region
      _
    $region49: #{mlp_forward.1} parent=1 // pred_fallthru
      _
    // Predicated region
    $region50: #{mlp_forward.1} parent=1 // pred_check
      _
    $region51: #{mlp_forward.1} parent=1 // pred_check_branch
      %123 = sbr.rel (0) target = $region53
    $region52: #{mlp_forward.1} parent=1 // pred_region
      _
    $region53: #{mlp_forward.1} parent=1 // pred_fallthru
      _
    // Predicated region
    $region54: #{mlp_forward.1} parent=1 // pred_check
      _
    $region55: #{mlp_forward.1} parent=1 // pred_check_branch
      %125 = sbr.rel (0) target = $region57
    $region56: #{mlp_forward.1} parent=1 // pred_region
      %s127 = ssub.s32 512, 512
      %128 = vsyncadd [#allocation15], %s127
      %s129 = sshll.u32 [#allocation16], 4
      %s130 = int_to_ptr.vmem [resolvable:$true] %s129
      %135 = dma.hbm_to_vmem [thread:$0]  %s13, 512, %s130, [#allocation15], 64, 64, 4
    $region57: #{mlp_forward.1} parent=1 // pred_fallthru
      _
    // Predicated region
    $region58: #{mlp_forward.1} parent=1 // pred_check
      _
    $region59: #{mlp_forward.1} parent=1 // pred_check_branch
      %137 = sbr.rel (0) target = $region61
    $region60: #{mlp_forward.1} parent=1 // pred_region
      _
    $region61: #{mlp_forward.1} parent=1 // pred_fallthru
      _
    // Predicated region
    $region62: #{mlp_forward.1} parent=1 // pred_check
      _
    $region63: #{mlp_forward.1} parent=1 // pred_check_branch
      %139 = sbr.rel (0) target = $region65
    $region64: #{mlp_forward.1} parent=1 // pred_region
      %140 = dma.done [#allocation3], 128
    $region65: #{mlp_forward.1} parent=1 // pred_fallthru
      _
    // Predicated region
    $region66: #{mlp_forward.1} parent=1 // pred_check
      _
    $region67: #{mlp_forward.1} parent=1 // pred_check_branch
      %142 = sbr.rel (0) target = $region69
    $region68: #{mlp_forward.1} parent=1 // pred_region
      %143 = dma.done [#allocation6], 256
    $region69: #{mlp_forward.1} parent=1 // pred_fallthru
      _
    // Predicated region
    $region70: #{mlp_forward.1} parent=1 // pred_check
      _
    $region71: #{mlp_forward.1} parent=1 // pred_check_branch
      %145 = sbr.rel (0) target = $region73
    $region72: #{mlp_forward.1} parent=1 // pred_region
      %146 = dma.done [#allocation6], 16
    $region73: #{mlp_forward.1} parent=1 // pred_fallthru
      _
    // Predicated region
    $region74: #{mlp_forward.1} parent=1 // pred_check
      _
    $region75: #{mlp_forward.1} parent=1 // pred_check_branch
      %148 = sbr.rel (0) target = $region77
    $region76: #{mlp_forward.1} parent=1 // pred_region
      %149 = dma.done [#allocation9], 512
    $region77: #{mlp_forward.1} parent=1 // pred_fallthru
      _
    // Predicated region
    $region78: #{mlp_forward.1} parent=1 // pred_check
      _
    $region79: #{mlp_forward.1} parent=1 // pred_check_branch
      %151 = sbr.rel (0) target = $region81
    $region80: #{mlp_forward.1} parent=1 // pred_region
      %152 = dma.done [#allocation9], 16
    $region81: #{mlp_forward.1} parent=1 // pred_fallthru
      _
    // Predicated region
    $region82: #{mlp_forward.1} parent=1 // pred_check
      _
    $region83: #{mlp_forward.1} parent=1 // pred_check_branch
      %154 = sbr.rel (0) target = $region85
    $region84: #{mlp_forward.1} parent=1 // pred_region
      %155 = dma.done [#allocation12], 2048
    $region85: #{mlp_forward.1} parent=1 // pred_fallthru
      _
    // Predicated region
    $region86: #{mlp_forward.1} parent=1 // pred_check
      _
    $region87: #{mlp_forward.1} parent=1 // pred_check_branch
      %157 = sbr.rel (0) target = $region89
    $region88: #{mlp_forward.1} parent=1 // pred_region
      %158 = dma.done [#allocation12], 4096
    $region89: #{mlp_forward.1} parent=1 // pred_fallthru
      _
    // Predicated region
    $region90: #{mlp_forward.1} parent=1 // pred_check
      _
    $region91: #{mlp_forward.1} parent=1 // pred_check_branch
      %160 = sbr.rel (0) target = $region93
    $region92: #{mlp_forward.1} parent=1 // pred_region
      %161 = dma.done [#allocation15], 32
    $region93: #{mlp_forward.1} parent=1 // pred_fallthru
      _
    // Predicated region
    $region94: #{mlp_forward.1} parent=1 // pred_check
      _
    $region95: #{mlp_forward.1} parent=1 // pred_check_branch
      %163 = sbr.rel (0) target = $region97
    $region96: #{mlp_forward.1} parent=1 // pred_region
      %164 = dma.done [#allocation15], 512
    $region97: #{mlp_forward.1} parent=1 // pred_fallthru
      _
    %v166 = vld [vmem:[#allocation2] sm:$0xff]
    %v167 = vpack.c.bf16 %v166, %v166
    %v168 = vld [vmem:[#allocation5] sm:$0xf]
    %v169 = vld [vmem:[#allocation5 + $0x4] sm:$0xf]
    %v170 = vld [vmem:[#allocation5 + $0x8] sm:$0xf]
    %v171 = vld [vmem:[#allocation5 + $0xc] sm:$0xf]
    %v172 = vld [vmem:[#allocation7] sm:$0x1]
    %v174 = vlaneseq
    %v175 = vshrl.u32 %v174, 7
    %v176 = vsub.s32 0, %v175
    %v177 = vrot.slane %v172, %v176
    %v183 = vunpack.c.l.b16 %v168
    %v184 = vunpack.c.l.b16 %v169
    %v185 = vunpack.c.l.b16 %v170
    %v186 = vunpack.c.l.b16 %v171
    %v187 = vpack.c.b16 %v184, %v183
    %v188 = vpack.c.b16 %v186, %v185
    %vm191 = vcmask 261120
    %v193 = vsel %vm191, %v167, 0
    %195 = vmatprep.subr.bf16.mxu0 0
    %196 = vmatpush1.bf16.msra.mxu0 %v187
    %197 = vmatprep.subr.bf16.mxu0 0
    %198 = vmatpush1.bf16.msra.mxu0 %v188
    %199 = vmatprep.subr.bf16.mxu0 0
    %200 = vmatpush1.bf16.msra.mxu0 0
    %201 = vmatprep.subr.bf16.mxu0 0
    %202 = vmatpush1.bf16.msra.mxu0 0
    %203 = vmatprep.subr.bf16.mxu0 0
    %204 = vmatpush1.bf16.msra.mxu0 0
    %205 = vmatprep.subr.bf16.mxu0 0
    %206 = vmatpush1.bf16.msra.mxu0 0
    %207 = vmatprep.subr.bf16.mxu0 0
    %208 = vmatpush1.bf16.msra.mxu0 0
    %209 = vmatprep.subr.bf16.mxu0 0
    %210 = vmatpush1.bf16.msra.mxu0 0
    %211 = vmatprep.subr.bf16.mxu0 0
    %212 = vmatpush1.bf16.msra.mxu0 0
    %213 = vmatprep.subr.bf16.mxu0 0
    %214 = vmatpush1.bf16.msra.mxu0 0
    %215 = vmatprep.subr.bf16.mxu0 0
    %216 = vmatpush1.bf16.msra.mxu0 0
    %217 = vmatprep.subr.bf16.mxu0 0
    %218 = vmatpush1.bf16.msra.mxu0 0
    %219 = vmatprep.subr.bf16.mxu0 0
    %220 = vmatpush1.bf16.msra.mxu0 0
    %221 = vmatprep.subr.bf16.mxu0 0
    %222 = vmatpush1.bf16.msra.mxu0 0
    %223 = vmatprep.subr.bf16.mxu0 0
    %224 = vmatpush1.bf16.msra.mxu0 0
    %225 = vmatprep.subr.bf16.mxu0 0
    %226 = vmatpush1.bf16.msra.mxu0 0
    %227 = vmatprep.mubr.bf16.mxu0 0
    %228 = vmatmul.mubr.bf16.gmra.mrb[0].mxu0 %v193
    %v229 = vpop.f32.mrb[0].mxu0
    %v230 = vadd.f32 %v177, %v229
    %v231 = vpop.f32.mrb[0].mxu0
    %v232 = vpop.f32.mrb[0].mxu0
    %v233 = vpop.f32.mrb[0].mxu0
    %234 = vdwg.mxu0
    %v235 = vmax.f32 %v230, 0.0
    %v236 = vpack.c.bf16 %v235, %v235
    %v237 = vld [vmem:[#allocation8] sm:$0xf]
    %v238 = vld [vmem:[#allocation8 + $0x4] sm:$0xf]
    %v239 = vld [vmem:[#allocation8 + $0x8] sm:$0xf]
    %v240 = vld [vmem:[#allocation8 + $0xc] sm:$0xf]
    %v241 = vld [vmem:[#allocation8 + $0x10] sm:$0xf]
    %v242 = vld [vmem:[#allocation8 + $0x14] sm:$0xf]
    %v243 = vld [vmem:[#allocation8 + $0x18] sm:$0xf]
    %v244 = vld [vmem:[#allocation8 + $0x1c] sm:$0xf]
    %v245 = vld [vmem:[#allocation10] sm:$0x1]
    %v247 = vlaneseq
    %v248 = vshrl.u32 %v247, 7
    %v249 = vsub.s32 0, %v248
    %v250 = vrot.slane %v245, %v249
    %v260 = vunpack.c.l.b16 %v237
    %v261 = vunpack.c.l.b16 %v238
    %v262 = vunpack.c.l.b16 %v239
    %v263 = vunpack.c.l.b16 %v240
    %v264 = vunpack.c.l.b16 %v241
    %v265 = vunpack.c.l.b16 %v242
    %v266 = vunpack.c.l.b16 %v243
    %v267 = vunpack.c.l.b16 %v244
    %v268 = vpack.c.b16 %v261, %v260
    %v269 = vpack.c.b16 %v263, %v262
    %v270 = vpack.c.b16 %v265, %v264
    %v271 = vpack.c.b16 %v267, %v266
    %vm276 = vcmask 523264
    %v278 = vsel %vm276, %v236, 0
    %280 = vmatprep.subr.bf16.mxu0 0
    %281 = vmatpush1.bf16.msra.mxu0 %v268
    %282 = vmatprep.subr.bf16.mxu0 0
    %283 = vmatpush1.bf16.msra.mxu0 %v269
    %284 = vmatprep.subr.bf16.mxu0 0
    %285 = vmatpush1.bf16.msra.mxu0 %v270
    %286 = vmatprep.subr.bf16.mxu0 0
    %287 = vmatpush1.bf16.msra.mxu0 %v271
    %288 = vmatprep.subr.bf16.mxu0 0
    %289 = vmatpush1.bf16.msra.mxu0 0
    %290 = vmatprep.subr.bf16.mxu0 0
    %291 = vmatpush1.bf16.msra.mxu0 0
    %292 = vmatprep.subr.bf16.mxu0 0
    %293 = vmatpush1.bf16.msra.mxu0 0
    %294 = vmatprep.subr.bf16.mxu0 0
    %295 = vmatpush1.bf16.msra.mxu0 0
    %296 = vmatprep.subr.bf16.mxu0 0
    %297 = vmatpush1.bf16.msra.mxu0 0
    %298 = vmatprep.subr.bf16.mxu0 0
    %299 = vmatpush1.bf16.msra.mxu0 0
    %300 = vmatprep.subr.bf16.mxu0 0
    %301 = vmatpush1.bf16.msra.mxu0 0
    %302 = vmatprep.subr.bf16.mxu0 0
    %303 = vmatpush1.bf16.msra.mxu0 0
    %304 = vmatprep.subr.bf16.mxu0 0
    %305 = vmatpush1.bf16.msra.mxu0 0
    %306 = vmatprep.subr.bf16.mxu0 0
    %307 = vmatpush1.bf16.msra.mxu0 0
    %308 = vmatprep.subr.bf16.mxu0 0
    %309 = vmatpush1.bf16.msra.mxu0 0
    %310 = vmatprep.subr.bf16.mxu0 0
    %311 = vmatpush1.bf16.msra.mxu0 0
    %312 = vmatprep.mubr.bf16.mxu0 0
    %313 = vmatmul.mubr.bf16.gmra.mrb[0].mxu0 %v278
    %v314 = vpop.f32.mrb[0].mxu0
    %v315 = vadd.f32 %v250, %v314
    %v316 = vpop.f32.mrb[0].mxu0
    %v317 = vpop.f32.mrb[0].mxu0
    %v318 = vpop.f32.mrb[0].mxu0
    %319 = vdwg.mxu0
    %v320 = vmax.f32 %v315, 0.0
    %v321 = vpack.c.bf16 %v320, %v320
    %v322 = vld [vmem:[#allocation11] sm:$0xff]
    %v323 = vld [vmem:[#allocation11 + $0x8] sm:$0xff]
    %v324 = vld [vmem:[#allocation11 + $0x10] sm:$0xff]
    %v325 = vld [vmem:[#allocation11 + $0x18] sm:$0xff]
    %v326 = vld [vmem:[#allocation11 + $0x20] sm:$0xff]
    %v327 = vld [vmem:[#allocation11 + $0x28] sm:$0xff]
    %v328 = vld [vmem:[#allocation11 + $0x30] sm:$0xff]
    %v329 = vld [vmem:[#allocation11 + $0x38] sm:$0xff]
    %v330 = vld [vmem:[#allocation11 + $0x40] sm:$0xff]
    %v331 = vld [vmem:[#allocation11 + $0x48] sm:$0xff]
    %v332 = vld [vmem:[#allocation11 + $0x50] sm:$0xff]
    %v333 = vld [vmem:[#allocation11 + $0x58] sm:$0xff]
    %v334 = vld [vmem:[#allocation11 + $0x60] sm:$0xff]
    %v335 = vld [vmem:[#allocation11 + $0x68] sm:$0xff]
    %v336 = vld [vmem:[#allocation11 + $0x70] sm:$0xff]
    %v337 = vld [vmem:[#allocation11 + $0x78] sm:$0xff]
    %v338 = vld [vmem:[%s6] sm:$0x3]
    %v340 = vlaneseq
    %v341 = vshrl.u32 %v340, 7
    %v342 = vsub.s32 0, %v341
    %v343 = vrot.slane %v338, %v342
    %v344 = vlaneseq
    %v345 = vshrl.u32 %v344, 7
    %v346 = vsub.s32 1, %v345
    %v347 = vrot.slane %v338, %v346
    %v366 = vunpack.c.l.b16 %v322
    %v367 = vunpack.c.h.b16 %v322
    %v368 = vunpack.c.l.b16 %v323
    %v369 = vunpack.c.h.b16 %v323
    %v370 = vunpack.c.l.b16 %v324
    %v371 = vunpack.c.h.b16 %v324
    %v372 = vunpack.c.l.b16 %v325
    %v373 = vunpack.c.h.b16 %v325
    %v374 = vunpack.c.l.b16 %v326
    %v375 = vunpack.c.h.b16 %v326
    %v376 = vunpack.c.l.b16 %v327
    %v377 = vunpack.c.h.b16 %v327
    %v378 = vunpack.c.l.b16 %v328
    %v379 = vunpack.c.h.b16 %v328
    %v380 = vunpack.c.l.b16 %v329
    %v381 = vunpack.c.h.b16 %v329
    %v382 = vunpack.c.l.b16 %v330
    %v383 = vunpack.c.h.b16 %v330
    %v384 = vunpack.c.l.b16 %v331
    %v385 = vunpack.c.h.b16 %v331
    %v386 = vunpack.c.l.b16 %v332
    %v387 = vunpack.c.h.b16 %v332
    %v388 = vunpack.c.l.b16 %v333
    %v389 = vunpack.c.h.b16 %v333
    %v390 = vunpack.c.l.b16 %v334
    %v391 = vunpack.c.h.b16 %v334
    %v392 = vunpack.c.l.b16 %v335
    %v393 = vunpack.c.h.b16 %v335
    %v394 = vunpack.c.l.b16 %v336
    %v395 = vunpack.c.h.b16 %v336
    %v396 = vunpack.c.l.b16 %v337
    %v397 = vunpack.c.h.b16 %v337
    %v398 = vpack.c.b16 %v368, %v366
    %v399 = vpack.c.b16 %v369, %v367
    %v400 = vpack.c.b16 %v372, %v370
    %v401 = vpack.c.b16 %v373, %v371
    %v402 = vpack.c.b16 %v376, %v374
    %v403 = vpack.c.b16 %v377, %v375
    %v404 = vpack.c.b16 %v380, %v378
    %v405 = vpack.c.b16 %v381, %v379
    %v406 = vpack.c.b16 %v384, %v382
    %v407 = vpack.c.b16 %v385, %v383
    %v408 = vpack.c.b16 %v388, %v386
    %v409 = vpack.c.b16 %v389, %v387
    %v410 = vpack.c.b16 %v392, %v390
    %v411 = vpack.c.b16 %v393, %v391
    %v412 = vpack.c.b16 %v396, %v394
    %v413 = vpack.c.b16 %v397, %v395
    %430 = vmatprep.subr.bf16.mxu0 %v399
    %431 = vmatpush1.bf16.msra.mxu0 %v398
    %432 = vmatprep.subr.bf16.mxu0 %v401
    %433 = vmatpush1.bf16.msra.mxu0 %v400
    %434 = vmatprep.subr.bf16.mxu0 %v403
    %435 = vmatpush1.bf16.msra.mxu0 %v402
    %436 = vmatprep.subr.bf16.mxu0 %v405
    %437 = vmatpush1.bf16.msra.mxu0 %v404
    %438 = vmatprep.subr.bf16.mxu0 %v407
    %439 = vmatpush1.bf16.msra.mxu0 %v406
    %440 = vmatprep.subr.bf16.mxu0 %v409
    %441 = vmatpush1.bf16.msra.mxu0 %v408
    %442 = vmatprep.subr.bf16.mxu0 %v411
    %443 = vmatpush1.bf16.msra.mxu0 %v410
    %444 = vmatprep.subr.bf16.mxu0 %v413
    %445 = vmatpush1.bf16.msra.mxu0 %v412
    %446 = vmatprep.subr.bf16.mxu0 0
    %447 = vmatpush1.bf16.msra.mxu0 0
    %448 = vmatprep.subr.bf16.mxu0 0
    %449 = vmatpush1.bf16.msra.mxu0 0
    %450 = vmatprep.subr.bf16.mxu0 0
    %451 = vmatpush1.bf16.msra.mxu0 0
    %452 = vmatprep.subr.bf16.mxu0 0
    %453 = vmatpush1.bf16.msra.mxu0 0
    %454 = vmatprep.subr.bf16.mxu0 0
    %455 = vmatpush1.bf16.msra.mxu0 0
    %456 = vmatprep.subr.bf16.mxu0 0
    %457 = vmatpush1.bf16.msra.mxu0 0
    %458 = vmatprep.subr.bf16.mxu0 0
    %459 = vmatpush1.bf16.msra.mxu0 0
    %460 = vmatprep.subr.bf16.mxu0 0
    %461 = vmatpush1.bf16.msra.mxu0 0
    %462 = vmatprep.mubr.bf16.mxu0 0
    %463 = vmatmul.mubr.bf16.gmra.mrb[0].mxu0 %v321
    %v464 = vpop.f32.mrb[0].mxu0
    %v465 = vadd.f32 %v343, %v464
    %v466 = vpop.f32.mrb[0].mxu0
    %v467 = vadd.f32 %v347, %v466
    %v468 = vpop.f32.mrb[0].mxu0
    %v469 = vpop.f32.mrb[0].mxu0
    %470 = vdwg.mxu0
    %v471 = vmax.f32 %v465, 0.0
    %v472 = vmax.f32 %v467, 0.0
    %v473 = vpack.c.bf16 %v471, %v471
    %v474 = vpack.c.bf16 %v472, %v472
    %v475 = vld [vmem:[#allocation13] sm:$0xff]
    %v476 = vld [vmem:[#allocation13 + $0x8] sm:$0xff]
    %v477 = vld [vmem:[#allocation13 + $0x10] sm:$0xff]
    %v478 = vld [vmem:[#allocation13 + $0x18] sm:$0xff]
    %v479 = vld [vmem:[#allocation13 + $0x20] sm:$0xff]
    %v480 = vld [vmem:[#allocation13 + $0x28] sm:$0xff]
    %v481 = vld [vmem:[#allocation13 + $0x30] sm:$0xff]
    %v482 = vld [vmem:[#allocation13 + $0x38] sm:$0xff]
    %v483 = vld [vmem:[#allocation13 + $0x40] sm:$0xff]
    %v484 = vld [vmem:[#allocation13 + $0x48] sm:$0xff]
    %v485 = vld [vmem:[#allocation13 + $0x50] sm:$0xff]
    %v486 = vld [vmem:[#allocation13 + $0x58] sm:$0xff]
    %v487 = vld [vmem:[#allocation13 + $0x60] sm:$0xff]
    %v488 = vld [vmem:[#allocation13 + $0x68] sm:$0xff]
    %v489 = vld [vmem:[#allocation13 + $0x70] sm:$0xff]
    %v490 = vld [vmem:[#allocation13 + $0x78] sm:$0xff]
    %v491 = vld [vmem:[#allocation13 + $0x80] sm:$0xff]
    %v492 = vld [vmem:[#allocation13 + $0x88] sm:$0xff]
    %v493 = vld [vmem:[#allocation13 + $0x90] sm:$0xff]
    %v494 = vld [vmem:[#allocation13 + $0x98] sm:$0xff]
    %v495 = vld [vmem:[#allocation13 + $0xa0] sm:$0xff]
    %v496 = vld [vmem:[#allocation13 + $0xa8] sm:$0xff]
    %v497 = vld [vmem:[#allocation13 + $0xb0] sm:$0xff]
    %v498 = vld [vmem:[#allocation13 + $0xb8] sm:$0xff]
    %v499 = vld [vmem:[#allocation13 + $0xc0] sm:$0xff]
    %v500 = vld [vmem:[#allocation13 + $0xc8] sm:$0xff]
    %v501 = vld [vmem:[#allocation13 + $0xd0] sm:$0xff]
    %v502 = vld [vmem:[#allocation13 + $0xd8] sm:$0xff]
    %v503 = vld [vmem:[#allocation13 + $0xe0] sm:$0xff]
    %v504 = vld [vmem:[#allocation13 + $0xe8] sm:$0xff]
    %v505 = vld [vmem:[#allocation13 + $0xf0] sm:$0xff]
    %v506 = vld [vmem:[#allocation13 + $0xf8] sm:$0xff]
    %v507 = vld [vmem:[#allocation14] sm:$0x3]
    %v509 = vlaneseq
    %v510 = vshrl.u32 %v509, 7
    %v511 = vsub.s32 0, %v510
    %v512 = vrot.slane %v507, %v511
    %v513 = vlaneseq
    %v514 = vshrl.u32 %v513, 7
    %v515 = vsub.s32 1, %v514
    %v516 = vrot.slane %v507, %v515
    %v551 = vunpack.c.l.b16 %v475
    %v552 = vunpack.c.h.b16 %v475
    %v553 = vunpack.c.l.b16 %v476
    %v554 = vunpack.c.h.b16 %v476
    %v555 = vunpack.c.l.b16 %v477
    %v556 = vunpack.c.h.b16 %v477
    %v557 = vunpack.c.l.b16 %v478
    %v558 = vunpack.c.h.b16 %v478
    %v559 = vunpack.c.l.b16 %v479
    %v560 = vunpack.c.h.b16 %v479
    %v561 = vunpack.c.l.b16 %v480
    %v562 = vunpack.c.h.b16 %v480
    %v563 = vunpack.c.l.b16 %v481
    %v564 = vunpack.c.h.b16 %v481
    %v565 = vunpack.c.l.b16 %v482
    %v566 = vunpack.c.h.b16 %v482
    %v567 = vunpack.c.l.b16 %v483
    %v568 = vunpack.c.h.b16 %v483
    %v569 = vunpack.c.l.b16 %v484
    %v570 = vunpack.c.h.b16 %v484
    %v571 = vunpack.c.l.b16 %v485
    %v572 = vunpack.c.h.b16 %v485
    %v573 = vunpack.c.l.b16 %v486
    %v574 = vunpack.c.h.b16 %v486
    %v575 = vunpack.c.l.b16 %v487
    %v576 = vunpack.c.h.b16 %v487
    %v577 = vunpack.c.l.b16 %v488
    %v578 = vunpack.c.h.b16 %v488
    %v579 = vunpack.c.l.b16 %v489
    %v580 = vunpack.c.h.b16 %v489
    %v581 = vunpack.c.l.b16 %v490
    %v582 = vunpack.c.h.b16 %v490
    %v583 = vunpack.c.l.b16 %v491
    %v584 = vunpack.c.h.b16 %v491
    %v585 = vunpack.c.l.b16 %v492
    %v586 = vunpack.c.h.b16 %v492
    %v587 = vunpack.c.l.b16 %v493
    %v588 = vunpack.c.h.b16 %v493
    %v589 = vunpack.c.l.b16 %v494
    %v590 = vunpack.c.h.b16 %v494
    %v591 = vunpack.c.l.b16 %v495
    %v592 = vunpack.c.h.b16 %v495
    %v593 = vunpack.c.l.b16 %v496
    %v594 = vunpack.c.h.b16 %v496
    %v595 = vunpack.c.l.b16 %v497
    %v596 = vunpack.c.h.b16 %v497
    %v597 = vunpack.c.l.b16 %v498
    %v598 = vunpack.c.h.b16 %v498
    %v599 = vunpack.c.l.b16 %v499
    %v600 = vunpack.c.h.b16 %v499
    %v601 = vunpack.c.l.b16 %v500
    %v602 = vunpack.c.h.b16 %v500
    %v603 = vunpack.c.l.b16 %v501
    %v604 = vunpack.c.h.b16 %v501
    %v605 = vunpack.c.l.b16 %v502
    %v606 = vunpack.c.h.b16 %v502
    %v607 = vunpack.c.l.b16 %v503
    %v608 = vunpack.c.h.b16 %v503
    %v609 = vunpack.c.l.b16 %v504
    %v610 = vunpack.c.h.b16 %v504
    %v611 = vunpack.c.l.b16 %v505
    %v612 = vunpack.c.h.b16 %v505
    %v613 = vunpack.c.l.b16 %v506
    %v614 = vunpack.c.h.b16 %v506
    %v615 = vpack.c.b16 %v553, %v551
    %v616 = vpack.c.b16 %v554, %v552
    %v617 = vpack.c.b16 %v557, %v555
    %v618 = vpack.c.b16 %v558, %v556
    %v619 = vpack.c.b16 %v561, %v559
    %v620 = vpack.c.b16 %v562, %v560
    %v621 = vpack.c.b16 %v565, %v563
    %v622 = vpack.c.b16 %v566, %v564
    %v623 = vpack.c.b16 %v569, %v567
    %v624 = vpack.c.b16 %v570, %v568
    %v625 = vpack.c.b16 %v573, %v571
    %v626 = vpack.c.b16 %v574, %v572
    %v627 = vpack.c.b16 %v577, %v575
    %v628 = vpack.c.b16 %v578, %v576
    %v629 = vpack.c.b16 %v581, %v579
    %v630 = vpack.c.b16 %v582, %v580
    %v631 = vpack.c.b16 %v585, %v583
    %v632 = vpack.c.b16 %v586, %v584
    %v633 = vpack.c.b16 %v589, %v587
    %v634 = vpack.c.b16 %v590, %v588
    %v635 = vpack.c.b16 %v593, %v591
    %v636 = vpack.c.b16 %v594, %v592
    %v637 = vpack.c.b16 %v597, %v595
    %v638 = vpack.c.b16 %v598, %v596
    %v639 = vpack.c.b16 %v601, %v599
    %v640 = vpack.c.b16 %v602, %v600
    %v641 = vpack.c.b16 %v605, %v603
    %v642 = vpack.c.b16 %v606, %v604
    %v643 = vpack.c.b16 %v609, %v607
    %v644 = vpack.c.b16 %v610, %v608
    %v645 = vpack.c.b16 %v613, %v611
    %v646 = vpack.c.b16 %v614, %v612
    %679 = vmatprep.subr.bf16.mxu0 %v616
    %680 = vmatpush1.bf16.msra.mxu0 %v615
    %681 = vmatprep.subr.bf16.mxu0 %v618
    %682 = vmatpush1.bf16.msra.mxu0 %v617
    %683 = vmatprep.subr.bf16.mxu0 %v620
    %684 = vmatpush1.bf16.msra.mxu0 %v619
    %685 = vmatprep.subr.bf16.mxu0 %v622
    %686 = vmatpush1.bf16.msra.mxu0 %v621
    %687 = vmatprep.subr.bf16.mxu0 %v624
    %688 = vmatpush1.bf16.msra.mxu0 %v623
    %689 = vmatprep.subr.bf16.mxu0 %v626
    %690 = vmatpush1.bf16.msra.mxu0 %v625
    %691 = vmatprep.subr.bf16.mxu0 %v628
    %692 = vmatpush1.bf16.msra.mxu0 %v627
    %693 = vmatprep.subr.bf16.mxu0 %v630
    %694 = vmatpush1.bf16.msra.mxu0 %v629
    %695 = vmatprep.subr.bf16.mxu0 %v632
    %696 = vmatpush1.bf16.msra.mxu0 %v631
    %697 = vmatprep.subr.bf16.mxu0 %v634
    %698 = vmatpush1.bf16.msra.mxu0 %v633
    %699 = vmatprep.subr.bf16.mxu0 %v636
    %700 = vmatpush1.bf16.msra.mxu0 %v635
    %701 = vmatprep.subr.bf16.mxu0 %v638
    %702 = vmatpush1.bf16.msra.mxu0 %v637
    %703 = vmatprep.subr.bf16.mxu0 %v640
    %704 = vmatpush1.bf16.msra.mxu0 %v639
    %705 = vmatprep.subr.bf16.mxu0 %v642
    %706 = vmatpush1.bf16.msra.mxu0 %v641
    %707 = vmatprep.subr.bf16.mxu0 %v644
    %708 = vmatpush1.bf16.msra.mxu0 %v643
    %709 = vmatprep.subr.bf16.mxu0 %v646
    %710 = vmatpush1.bf16.msra.mxu0 %v645
    %711 = vmatprep.mubr.bf16.mxu0 %v474
    %712 = vmatmul.mubr.bf16.gmra.mrb[0].mxu0 %v473
    %v713 = vpop.f32.mrb[0].mxu0
    %v714 = vadd.f32 %v512, %v713
    %v715 = vpop.f32.mrb[0].mxu0
    %v716 = vadd.f32 %v516, %v715
    %v717 = vpop.f32.mrb[0].mxu0
    %v718 = vpop.f32.mrb[0].mxu0
    %719 = vdwg.mxu0
    %v720 = vmax.f32 %v714, 0.0
    %v721 = vmax.f32 %v716, 0.0
    %v722 = vpack.c.bf16 %v720, %v720
    %v723 = vpack.c.bf16 %v721, %v721
    %v724 = vld [vmem:[%s9] sm:$0xf]
    %v725 = vld [vmem:[%s9 + $0x4] sm:$0xf]
    %v726 = vld [vmem:[%s9 + $0x8] sm:$0xf]
    %v727 = vld [vmem:[%s9 + $0xc] sm:$0xf]
    %v728 = vld [vmem:[%s9 + $0x10] sm:$0xf]
    %v729 = vld [vmem:[%s9 + $0x14] sm:$0xf]
    %v730 = vld [vmem:[%s9 + $0x18] sm:$0xf]
    %v731 = vld [vmem:[%s9 + $0x1c] sm:$0xf]
    %v732 = vld [vmem:[%s9 + $0x20] sm:$0xf]
    %v733 = vld [vmem:[%s9 + $0x24] sm:$0xf]
    %v734 = vld [vmem:[%s9 + $0x28] sm:$0xf]
    %v735 = vld [vmem:[%s9 + $0x2c] sm:$0xf]
    %v736 = vld [vmem:[%s9 + $0x30] sm:$0xf]
    %v737 = vld [vmem:[%s9 + $0x34] sm:$0xf]
    %v738 = vld [vmem:[%s9 + $0x38] sm:$0xf]
    %v739 = vld [vmem:[%s9 + $0x3c] sm:$0xf]
    %v740 = vld [vmem:[%s9 + $0x40] sm:$0xf]
    %v741 = vld [vmem:[%s9 + $0x44] sm:$0xf]
    %v742 = vld [vmem:[%s9 + $0x48] sm:$0xf]
    %v743 = vld [vmem:[%s9 + $0x4c] sm:$0xf]
    %v744 = vld [vmem:[%s9 + $0x50] sm:$0xf]
    %v745 = vld [vmem:[%s9 + $0x54] sm:$0xf]
    %v746 = vld [vmem:[%s9 + $0x58] sm:$0xf]
    %v747 = vld [vmem:[%s9 + $0x5c] sm:$0xf]
    %v748 = vld [vmem:[%s9 + $0x60] sm:$0xf]
    %v749 = vld [vmem:[%s9 + $0x64] sm:$0xf]
    %v750 = vld [vmem:[%s9 + $0x68] sm:$0xf]
    %v751 = vld [vmem:[%s9 + $0x6c] sm:$0xf]
    %v752 = vld [vmem:[%s9 + $0x70] sm:$0xf]
    %v753 = vld [vmem:[%s9 + $0x74] sm:$0xf]
    %v754 = vld [vmem:[%s9 + $0x78] sm:$0xf]
    %v755 = vld [vmem:[%s9 + $0x7c] sm:$0xf]
    %v756 = vld [vmem:[%s10] sm:$0x1]
    %v758 = vlaneseq
    %v759 = vshrl.u32 %v758, 7
    %v760 = vsub.s32 0, %v759
    %v761 = vrot.slane %v756, %v760
    %v795 = vunpack.c.l.b16 %v724
    %v796 = vunpack.c.l.b16 %v725
    %v797 = vunpack.c.l.b16 %v726
    %v798 = vunpack.c.l.b16 %v727
    %v799 = vunpack.c.l.b16 %v728
    %v800 = vunpack.c.l.b16 %v729
    %v801 = vunpack.c.l.b16 %v730
    %v802 = vunpack.c.l.b16 %v731
    %v803 = vunpack.c.l.b16 %v732
    %v804 = vunpack.c.l.b16 %v733
    %v805 = vunpack.c.l.b16 %v734
    %v806 = vunpack.c.l.b16 %v735
    %v807 = vunpack.c.l.b16 %v736
    %v808 = vunpack.c.l.b16 %v737
    %v809 = vunpack.c.l.b16 %v738
    %v810 = vunpack.c.l.b16 %v739
    %v811 = vunpack.c.l.b16 %v740
    %v812 = vunpack.c.l.b16 %v741
    %v813 = vunpack.c.l.b16 %v742
    %v814 = vunpack.c.l.b16 %v743
    %v815 = vunpack.c.l.b16 %v744
    %v816 = vunpack.c.l.b16 %v745
    %v817 = vunpack.c.l.b16 %v746
    %v818 = vunpack.c.l.b16 %v747
    %v819 = vunpack.c.l.b16 %v748
    %v820 = vunpack.c.l.b16 %v749
    %v821 = vunpack.c.l.b16 %v750
    %v822 = vunpack.c.l.b16 %v751
    %v823 = vunpack.c.l.b16 %v752
    %v824 = vunpack.c.l.b16 %v753
    %v825 = vunpack.c.l.b16 %v754
    %v826 = vunpack.c.l.b16 %v755
    %v827 = vpack.c.b16 %v796, %v795
    %v828 = vpack.c.b16 %v798, %v797
    %v829 = vpack.c.b16 %v800, %v799
    %v830 = vpack.c.b16 %v802, %v801
    %v831 = vpack.c.b16 %v804, %v803
    %v832 = vpack.c.b16 %v806, %v805
    %v833 = vpack.c.b16 %v808, %v807
    %v834 = vpack.c.b16 %v810, %v809
    %v835 = vpack.c.b16 %v812, %v811
    %v836 = vpack.c.b16 %v814, %v813
    %v837 = vpack.c.b16 %v816, %v815
    %v838 = vpack.c.b16 %v818, %v817
    %v839 = vpack.c.b16 %v820, %v819
    %v840 = vpack.c.b16 %v822, %v821
    %v841 = vpack.c.b16 %v824, %v823
    %v842 = vpack.c.b16 %v826, %v825
    %859 = vmatprep.subr.bf16.mxu0 0
    %860 = vmatpush1.bf16.msra.mxu0 %v827
    %861 = vmatprep.subr.bf16.mxu0 0
    %862 = vmatpush1.bf16.msra.mxu0 %v828
    %863 = vmatprep.subr.bf16.mxu0 0
    %864 = vmatpush1.bf16.msra.mxu0 %v829
    %865 = vmatprep.subr.bf16.mxu0 0
    %866 = vmatpush1.bf16.msra.mxu0 %v830
    %867 = vmatprep.subr.bf16.mxu0 0
    %868 = vmatpush1.bf16.msra.mxu0 %v831
    %869 = vmatprep.subr.bf16.mxu0 0
    %870 = vmatpush1.bf16.msra.mxu0 %v832
    %871 = vmatprep.subr.bf16.mxu0 0
    %872 = vmatpush1.bf16.msra.mxu0 %v833
    %873 = vmatprep.subr.bf16.mxu0 0
    %874 = vmatpush1.bf16.msra.mxu0 %v834
    %875 = vmatprep.subr.bf16.mxu0 0
    %876 = vmatpush1.bf16.msra.mxu0 %v835
    %877 = vmatprep.subr.bf16.mxu0 0
    %878 = vmatpush1.bf16.msra.mxu0 %v836
    %879 = vmatprep.subr.bf16.mxu0 0
    %880 = vmatpush1.bf16.msra.mxu0 %v837
    %881 = vmatprep.subr.bf16.mxu0 0
    %882 = vmatpush1.bf16.msra.mxu0 %v838
    %883 = vmatprep.subr.bf16.mxu0 0
    %884 = vmatpush1.bf16.msra.mxu0 %v839
    %885 = vmatprep.subr.bf16.mxu0 0
    %886 = vmatpush1.bf16.msra.mxu0 %v840
    %887 = vmatprep.subr.bf16.mxu0 0
    %888 = vmatpush1.bf16.msra.mxu0 %v841
    %889 = vmatprep.subr.bf16.mxu0 0
    %890 = vmatpush1.bf16.msra.mxu0 %v842
    %891 = vmatprep.mubr.bf16.mxu0 %v723
    %892 = vmatmul.mubr.bf16.gmra.mrb[0].mxu0 %v722
    %v893 = vpop.f32.mrb[0].mxu0
    %v894 = vadd.f32 %v761, %v893
    %v895 = vpop.f32.mrb[0].mxu0
    %v896 = vpop.f32.mrb[0].mxu0
    %v897 = vpop.f32.mrb[0].mxu0
    %898 = vdwg.mxu0
    %v899 = vmax.f32 %v894, 0.0
    %v900 = vpack.c.bf16 %v899, %v899
    %v901 = vld [vmem:[%s11] sm:$0xf]
    %v902 = vld [vmem:[%s11 + $0x4] sm:$0xf]
    %v903 = vld [vmem:[%s11 + $0x8] sm:$0xf]
    %v904 = vld [vmem:[%s11 + $0xc] sm:$0xf]
    %v905 = vld [vmem:[%s11 + $0x10] sm:$0xf]
    %v906 = vld [vmem:[%s11 + $0x14] sm:$0xf]
    %v907 = vld [vmem:[%s11 + $0x18] sm:$0xf]
    %v908 = vld [vmem:[%s11 + $0x1c] sm:$0xf]
    %v909 = vld [vmem:[%s11 + $0x20] sm:$0xf]
    %v910 = vld [vmem:[%s11 + $0x24] sm:$0xf]
    %v911 = vld [vmem:[%s11 + $0x28] sm:$0xf]
    %v912 = vld [vmem:[%s11 + $0x2c] sm:$0xf]
    %v913 = vld [vmem:[%s11 + $0x30] sm:$0xf]
    %v914 = vld [vmem:[%s11 + $0x34] sm:$0xf]
    %v915 = vld [vmem:[%s11 + $0x38] sm:$0xf]
    %v916 = vld [vmem:[%s11 + $0x3c] sm:$0xf]
    %v917 = vld [vmem:[%s12] sm:$0x1]
    %v919 = vlaneseq
    %v920 = vshrl.u32 %v919, 7
    %v921 = vsub.s32 0, %v920
    %v922 = vrot.slane %v917, %v921
    %v940 = vunpack.c.l.b16 %v901
    %v941 = vunpack.c.l.b16 %v902
    %v942 = vunpack.c.l.b16 %v903
    %v943 = vunpack.c.l.b16 %v904
    %v944 = vunpack.c.l.b16 %v905
    %v945 = vunpack.c.l.b16 %v906
    %v946 = vunpack.c.l.b16 %v907
    %v947 = vunpack.c.l.b16 %v908
    %v948 = vunpack.c.l.b16 %v909
    %v949 = vunpack.c.l.b16 %v910
    %v950 = vunpack.c.l.b16 %v911
    %v951 = vunpack.c.l.b16 %v912
    %v952 = vunpack.c.l.b16 %v913
    %v953 = vunpack.c.l.b16 %v914
    %v954 = vunpack.c.l.b16 %v915
    %v955 = vunpack.c.l.b16 %v916
    %v956 = vpack.c.b16 %v941, %v940
    %v957 = vpack.c.b16 %v943, %v942
    %v958 = vpack.c.b16 %v945, %v944
    %v959 = vpack.c.b16 %v947, %v946
    %v960 = vpack.c.b16 %v949, %v948
    %v961 = vpack.c.b16 %v951, %v950
    %v962 = vpack.c.b16 %v953, %v952
    %v963 = vpack.c.b16 %v955, %v954
    %972 = vmatprep.subr.bf16.mxu0 0
    %973 = vmatpush1.bf16.msra.mxu0 %v956
    %974 = vmatprep.subr.bf16.mxu0 0
    %975 = vmatpush1.bf16.msra.mxu0 %v957
    %976 = vmatprep.subr.bf16.mxu0 0
    %977 = vmatpush1.bf16.msra.mxu0 %v958
    %978 = vmatprep.subr.bf16.mxu0 0
    %979 = vmatpush1.bf16.msra.mxu0 %v959
    %980 = vmatprep.subr.bf16.mxu0 0
    %981 = vmatpush1.bf16.msra.mxu0 %v960
    %982 = vmatprep.subr.bf16.mxu0 0
    %983 = vmatpush1.bf16.msra.mxu0 %v961
    %984 = vmatprep.subr.bf16.mxu0 0
    %985 = vmatpush1.bf16.msra.mxu0 %v962
    %986 = vmatprep.subr.bf16.mxu0 0
    %987 = vmatpush1.bf16.msra.mxu0 %v963
    %988 = vmatprep.subr.bf16.mxu0 0
    %989 = vmatpush1.bf16.msra.mxu0 0
    %990 = vmatprep.subr.bf16.mxu0 0
    %991 = vmatpush1.bf16.msra.mxu0 0
    %992 = vmatprep.subr.bf16.mxu0 0
    %993 = vmatpush1.bf16.msra.mxu0 0
    %994 = vmatprep.subr.bf16.mxu0 0
    %995 = vmatpush1.bf16.msra.mxu0 0
    %996 = vmatprep.subr.bf16.mxu0 0
    %997 = vmatpush1.bf16.msra.mxu0 0
    %998 = vmatprep.subr.bf16.mxu0 0
    %999 = vmatpush1.bf16.msra.mxu0 0
    %1000 = vmatprep.subr.bf16.mxu0 0
    %1001 = vmatpush1.bf16.msra.mxu0 0
    %1002 = vmatprep.subr.bf16.mxu0 0
    %1003 = vmatpush1.bf16.msra.mxu0 0
    %1004 = vmatprep.mubr.bf16.mxu0 0
    %1005 = vmatmul.mubr.bf16.gmra.mrb[0].mxu0 %v900
    %v1006 = vpop.f32.mrb[0].mxu0
    %v1007 = vadd.f32 %v922, %v1006
    %v1008 = vpop.f32.mrb[0].mxu0
    %v1009 = vpop.f32.mrb[0].mxu0
    %v1010 = vpop.f32.mrb[0].mxu0
    %1011 = vdwg.mxu0
    %v1012 = vmax.f32 %v1007, 0.0
    %v1013 = vpack.c.bf16 %v1012, %v1012
    %v1014 = vld [vmem:[#allocation16] sm:$0xf]
    %v1015 = vld [vmem:[#allocation16 + $0x4] sm:$0xf]
    %v1016 = vld [vmem:[#allocation16 + $0x8] sm:$0xf]
    %v1017 = vld [vmem:[#allocation16 + $0xc] sm:$0xf]
    %v1018 = vld [vmem:[#allocation16 + $0x10] sm:$0xf]
    %v1019 = vld [vmem:[#allocation16 + $0x14] sm:$0xf]
    %v1020 = vld [vmem:[#allocation16 + $0x18] sm:$0xf]
    %v1021 = vld [vmem:[#allocation16 + $0x1c] sm:$0xf]
    %v1022 = vld [vmem:[%s14] sm:$0x1]
    %v1024 = vlaneseq
    %v1025 = vshrl.u32 %v1024, 7
    %v1026 = vsub.s32 0, %v1025
    %v1027 = vrot.slane %v1022, %v1026
    %v1037 = vunpack.c.l.b16 %v1014
    %v1038 = vunpack.c.l.b16 %v1015
    %v1039 = vunpack.c.l.b16 %v1016
    %v1040 = vunpack.c.l.b16 %v1017
    %v1041 = vunpack.c.l.b16 %v1018
    %v1042 = vunpack.c.l.b16 %v1019
    %v1043 = vunpack.c.l.b16 %v1020
    %v1044 = vunpack.c.l.b16 %v1021
    %v1045 = vpack.c.b16 %v1038, %v1037
    %v1046 = vpack.c.b16 %v1040, %v1039
    %v1047 = vpack.c.b16 %v1042, %v1041
    %v1048 = vpack.c.b16 %v1044, %v1043
    %v1054 = vsel %vm276, %v1013, 0
    %1056 = vmatprep.subr.bf16.mxu0 0
    %1057 = vmatpush1.bf16.msra.mxu0 %v1045
    %1058 = vmatprep.subr.bf16.mxu0 0
    %1059 = vmatpush1.bf16.msra.mxu0 %v1046
    %1060 = vmatprep.subr.bf16.mxu0 0
    %1061 = vmatpush1.bf16.msra.mxu0 %v1047
    %1062 = vmatprep.subr.bf16.mxu0 0
    %1063 = vmatpush1.bf16.msra.mxu0 %v1048
    %1064 = vmatprep.subr.bf16.mxu0 0
    %1065 = vmatpush1.bf16.msra.mxu0 0
    %1066 = vmatprep.subr.bf16.mxu0 0
    %1067 = vmatpush1.bf16.msra.mxu0 0
    %1068 = vmatprep.subr.bf16.mxu0 0
    %1069 = vmatpush1.bf16.msra.mxu0 0
    %1070 = vmatprep.subr.bf16.mxu0 0
    %1071 = vmatpush1.bf16.msra.mxu0 0
    %1072 = vmatprep.subr.bf16.mxu0 0
    %1073 = vmatpush1.bf16.msra.mxu0 0
    %1074 = vmatprep.subr.bf16.mxu0 0
    %1075 = vmatpush1.bf16.msra.mxu0 0
    %1076 = vmatprep.subr.bf16.mxu0 0
    %1077 = vmatpush1.bf16.msra.mxu0 0
    %1078 = vmatprep.subr.bf16.mxu0 0
    %1079 = vmatpush1.bf16.msra.mxu0 0
    %1080 = vmatprep.subr.bf16.mxu0 0
    %1081 = vmatpush1.bf16.msra.mxu0 0
    %1082 = vmatprep.subr.bf16.mxu0 0
    %1083 = vmatpush1.bf16.msra.mxu0 0
    %1084 = vmatprep.subr.bf16.mxu0 0
    %1085 = vmatpush1.bf16.msra.mxu0 0
    %1086 = vmatprep.subr.bf16.mxu0 0
    %1087 = vmatpush1.bf16.msra.mxu0 0
    %1088 = vmatprep.mubr.bf16.mxu0 0
    %1089 = vmatmul.mubr.bf16.gmra.mrb[0].mxu0 %v1054
    %v1090 = vpop.f32.mrb[0].mxu0
    %v1091 = vadd.f32 %v1027, %v1090
    %v1092 = vpop.f32.mrb[0].mxu0
    %v1093 = vpop.f32.mrb[0].mxu0
    %v1094 = vpop.f32.mrb[0].mxu0
    %1095 = vdwg.mxu0
    %1096 = vst [vmem:[#allocation17] sm:$0xff] %v1091
    // Predicated region
    $region98: #{mlp_forward.1} parent=1 // pred_check
      _
    $region99: #{mlp_forward.1} parent=1 // pred_check_branch
      %1098 = sbr.rel (0) target = $region101
    $region100: #{mlp_forward.1} parent=1 // pred_region
      %s1100 = ssub.s32 128, 128
      %1101 = vsyncadd [#allocation4], %s1100
      %s1103 = sshll.u32 [#allocation17], 4
      %s1104 = int_to_ptr.vmem [resolvable:$true] %s1103
      %1106 = dma.vmem_to_hbm [thread:$0]  %s1104, 128, %s15, [#allocation4]
    $region101: #{mlp_forward.1} parent=1 // pred_fallthru
      _
    // Predicated region
    $region102: #{mlp_forward.1} parent=1 // pred_check
      _
    $region103: #{mlp_forward.1} parent=1 // pred_check_branch
      %1108 = sbr.rel (0) target = $region105
    $region104: #{mlp_forward.1} parent=1 // pred_region
      %1109 = dma.done [#allocation4], 128
    $region105: #{mlp_forward.1} parent=1 // pred_fallthru
      _
    %1110 = vsyncpa [#allocation3], 1
    %1111 = vsyncpa [#allocation6], 1
    %1112 = vsyncpa [#allocation9], 1
    %1113 = vsyncpa [#allocation12], 1
    %1114 = vsyncpa [#allocation15], 1
    %1115 = vsyncpa [#allocation4], 1

</llo_original>
